<compile_context>
chip_gen: v5e
topology: v5e:2x2
jax: 0.10.0
libtpu: 0.0.40
codegen_flags: <defaults>
</compile_context>

<pallas_src>
import functools
import math

import numpy as np
import jax
import jax.numpy as jnp
from jax.experimental import pallas as pl
from jax.experimental.pallas import tpu as pltpu

# ---- model dims (input_dim must equal output_dim for this module to type-check) ----
D = 32          # attention_dim = output_dim = input_dim
H = 4           # num_heads
FF = 4 * D      # feed-forward hidden (== 128, matches the 128-lane vec slab)
N = 8           # instances per repertoire (seq)
G = 2           # number of repertoires (unique batch_index values)


# ------------------------- Pallas kernel (gridless, all groups at once) -------------------------

def cross_attn_kernel(x_ref, perm_ref, kvw_ref, oww_ref, w1_ref, w2_ref, vec_ref,
                      out_ref, *, num_heads):
    gn, d = x_ref.shape
    g = out_ref.shape[0]
    n = gn // g
    base = d + n                      # start of the small-vector rows in the vec slab

    dot = lambda a, b: jnp.dot(a, b, preferred_element_type=jnp.float32)

    def vrow(i):                      # (1, d) row of the packed bias/LN slab, lane offset 0
        return vec_ref[base + i:base + i + 1, 0:d]

    # ---- group rows (sorted group-major) via one-hot permutation matmul: in-kernel gather ----
    xs2 = dot(perm_ref[...], x_ref[...])                                  # (G*N, D)

    # ---- K/V projections: four (D,D) dots, each result at lane offset 0 ----
    k_i = (dot(xs2, kvw_ref[0]) + vrow(2)).reshape(g, n, d)
    v_i = (dot(xs2, kvw_ref[1]) + vrow(3)).reshape(g, n, d)
    k_e = (dot(xs2, kvw_ref[2]) + vrow(4)).reshape(g, n, d)
    v_e = (dot(xs2, kvw_ref[3]) + vrow(5)).reshape(g, n, d)

    sel = oww_ref[3]     # (D,D): cols [0,H) = head selector * 1/sqrt(d/H), rest exactly 0
    selT = oww_ref[4]    # (D,D): rows [0,H) = head broadcaster, rest exactly 0

    def layer_norm(x, gamma, beta, eps=1e-5):
        mu = jnp.mean(x, axis=-1, keepdims=True)
        var = jnp.mean((x - mu) ** 2, axis=-1, keepdims=True)
        return (x - mu) * jax.lax.rsqrt(var + eps) * gamma + beta

    def attend(q, k, v):
        """q: (1,1,D) or (G,1,D); single-query multi-head cross-attention over keys."""
        prod = k * q                                                      # (G, N, D)
        s = dot(prod.reshape(gn, d), sel).reshape(g, n, d)                # cols [0,H) = scaled scores
        s = s - jnp.max(s, axis=1, keepdims=True)                         # softmax over keys per group
        e = jnp.exp(s)
        p = e / jnp.sum(e, axis=1, keepdims=True)                         # exact division (tolerance)
        pb = dot(p.reshape(gn, d), selT).reshape(g, n, d)                 # head weights -> D lanes
        return jnp.sum(pb * v, axis=1), p                                 # (G, D), (G, N, D)

    tgt_emb = vrow(0)                                                     # (1, D)
    q_i = vrow(1)                                                         # precomputed tgt_emb@Wq_i+b

    # ---- interaction TransformerBlock ----
    o_i, _ = attend(q_i.reshape(1, 1, d), k_i, v_i)
    o_i = dot(o_i, oww_ref[0]) + vrow(6)                                  # out proj (wo_i, bo_i)
    tgt = layer_norm(tgt_emb + o_i, vrow(10), vrow(11))
    ff = jnp.maximum(dot(tgt, w1_ref[...]) + vec_ref[base + 16:base + 17, :], 0.0)
    ff = dot(ff, w2_ref[...]) + vrow(9)
    tgt = layer_norm(tgt + ff, vrow(12), vrow(13))

    # ---- ExtractionModule (returns attention weights) ----
    q_e = dot(tgt, oww_ref[1]) + vrow(7)                                  # (G, D)
    o_e, p_e = attend(q_e.reshape(g, 1, d), k_e, v_e)
    o_e = dot(o_e, oww_ref[2]) + vrow(8)
    tgt = layer_norm(tgt + o_e, vrow(14), vrow(15))                       # (G, D) attended features

    # ---- single lane-dense packed output: [features | head-mean attn | 0...] ----
    attn_mean = jnp.mean(p_e[:, :, 0:num_heads], axis=-1)                 # (G, N)
    pf = vec_ref[0:d, :]                                                  # (D, 128) exact placement
    pa = vec_ref[d:d + n, :]                                              # (N, 128) exact placement
    out_ref[...] = dot(tgt, pf) + dot(attn_mean, pa)                      # (G, 128), one full store


# ------------------------- jit wrapper (only op besides pallas_call: two output slices) ---------

@functools.partial(jax.jit, static_argnums=(2,))
def _forward_jit(x, kp, num_groups):
    d = x.shape[1]
    n = x.shape[0] // num_groups
    vmem = pl.BlockSpec(memory_space=pltpu.MemorySpace.VMEM)
    packed = pl.pallas_call(
        functools.partial(cross_attn_kernel, num_heads=H),
        out_shape=jax.ShapeDtypeStruct((num_groups, 128), jnp.float32),
        in_specs=[vmem] * 7,
        out_specs=vmem,
    )(x, kp['perm'], kp['kvw'], kp['oww'], kp['w1'], kp['w2'], kp['vec'])
    return packed[:, :d], packed[:, d:d + n]


def cross_attention_forward(x, kernel_params, *, num_groups):
    """Equivalent of CrossAttentionLayer.forward.

    Returns (attended_features (G, D), attentions (G, N)), where attentions are
    the extraction-block attention weights averaged over heads.
    """
    return _forward_jit(x, kernel_params, num_groups)


# ------------------------- params, one-time packing, pure-JAX reference -------------------------

def init_params(key):
    ks = jax.random.split(key, 12)

    def nrm(k, shape, scale=0.05):
        return scale * jax.random.normal(k, shape, dtype=jnp.float32)

    z = lambda *s: jnp.zeros(s, jnp.float32)
    return dict(
        tgt_emb=jax.random.normal(ks[0], (1, D), dtype=jnp.float32),   # target_emb (1,1,D) squeezed
        # interaction block MHA
        wq_i=nrm(ks[1], (D, D)), bq_i=z(1, D),
        wk_i=nrm(ks[2], (D, D)), bk_i=z(1, D),
        wv_i=nrm(ks[3], (D, D)), bv_i=z(1, D),
        wo_i=nrm(ks[4], (D, D)), bo_i=z(1, D),
        lni=jnp.stack([jnp.ones(D), jnp.zeros(D), jnp.ones(D), jnp.zeros(D)]).astype(jnp.float32),
        # interaction block FFN
        w1=nrm(ks[5], (D, FF)), b1=z(1, FF),
        w2=nrm(ks[6], (FF, D)), b2=z(1, D),
        # extraction block MHA
        wq_e=nrm(ks[7], (D, D)), bq_e=z(1, D),
        wk_e=nrm(ks[8], (D, D)), bk_e=z(1, D),
        wv_e=nrm(ks[9], (D, D)), bv_e=z(1, D),
        wo_e=nrm(ks[10], (D, D)), bo_e=z(1, D),
        lne=jnp.stack([jnp.ones(D), jnp.zeros(D)]).astype(jnp.float32),
    )


def pack_kernel_params(params, batch_index, num_groups):
    """One-time packing of parameters into a few lane-dense device slabs."""
    assert FF == 128, "vec slab packs b1 as one full 128-lane row (FF must equal 128)"
    p = params
    bi = np.asarray(batch_index)
    total = bi.shape[0]
    n = total // num_groups
    d = D
    assert d + n <= 128, "packed output needs D + N <= 128 lanes"
    # TODO(synk): equal-sized repertoires assumed; ragged groups need padding + masking.

    # host-side stable grouping -> one-hot permutation matrix (perm @ x == x[order])
    order = np.argsort(bi, kind='stable')
    perm = np.zeros((total, total), np.float32)
    perm[np.arange(total), order] = 1.0

    # K/V projection weights, stacked so each (D,D) slice lands at lane offset 0 in-kernel
    kvw = jnp.stack([p['wk_i'], p['wv_i'], p['wk_e'], p['wv_e']])          # (4, D, D)

    # head selector (scale folded in) / head broadcaster, zero-padded to (D,D)
    dh = d // H
    scale = 1.0 / math.sqrt(dh)
    sel = np.zeros((d, d), np.float32)
    selT = np.zeros((d, d), np.float32)
    for hh in range(H):
        sel[hh * dh:(hh + 1) * dh, hh] = scale
        selT[hh, hh * dh:(hh + 1) * dh] = 1.0
    oww = jnp.stack([p['wo_i'], p['wq_e'], p['wo_e'],
                     jnp.asarray(sel), jnp.asarray(selT)])                 # (5, D, D)

    # constant interaction query (input-independent) — drop wq_i/bq_i from the kernel
    q_i = np.asarray(p['tgt_emb'] @ p['wq_i'] + p['bq_i'])                 # (1, D)

    def row32(v):
        r = np.zeros((1, 128), np.float32)
        r[0, :d] = np.asarray(v).reshape(-1)
        return r

    # output placement matrices (exact 0/1 -> exact placement through the MXU)
    pf = np.zeros((d, 128), np.float32)
    pf[np.arange(d), np.arange(d)] = 1.0
    pa = np.zeros((n, 128), np.float32)
    pa[np.arange(n), d + np.arange(n)] = 1.0

    rows = [pf, pa,
            row32(p['tgt_emb']), row32(q_i),
            row32(p['bk_i']), row32(p['bv_i']), row32(p['bk_e']), row32(p['bv_e']),
            row32(p['bo_i']), row32(p['bq_e']), row32(p['bo_e']), row32(p['b2']),
            row32(p['lni'][0]), row32(p['lni'][1]), row32(p['lni'][2]), row32(p['lni'][3]),
            row32(p['lne'][0]), row32(p['lne'][1]),
            np.asarray(p['b1']).reshape(1, 128)]
    vec = np.concatenate(rows, axis=0)                                     # (D + N + 17, 128)

    return dict(perm=jnp.asarray(perm), kvw=kvw, oww=oww,
                w1=p['w1'], w2=p['w2'], vec=jnp.asarray(vec))


def reference_forward(x, batch_index, params, num_groups):
    """Independent pure-JAX reference (per-group loop, per-head loop)."""
    p = params
    d = x.shape[1]
    dh = d // H
    scale = 1.0 / math.sqrt(dh)

    def ln(v, gamma, beta, eps=1e-5):
        mu = jnp.mean(v, axis=-1, keepdims=True)
        var = jnp.mean((v - mu) ** 2, axis=-1, keepdims=True)
        return (v - mu) * jax.lax.rsqrt(var + eps) * gamma + beta

    def mha(tgt, xs, wq, bq, wk, bk, wv, bv, wo, bo):
        q = tgt @ wq + bq
        k = xs @ wk + bk
        v = xs @ wv + bv
        outs, ps = [], []
        for hh in range(H):
            sl = slice(hh * dh, (hh + 1) * dh)
            s = jnp.sum(k[:, sl] * q[:, sl], axis=-1, keepdims=True) * scale   # (N, 1)
            pw = jax.nn.softmax(s, axis=0)
            outs.append(jnp.sum(pw * v[:, sl], axis=0, keepdims=True))
            ps.append(pw)
        o = jnp.concatenate(outs, axis=-1) @ wo + bo
        return o, jnp.concatenate(ps, axis=-1)                                 # (1,D), (N,H)

    xb = np.asarray(x)
    bi = np.asarray(batch_index)
    feats, attns = [], []
    for r in np.unique(bi):
        xs = jnp.asarray(xb[bi == r])
        tgt = p['tgt_emb']
        o, _ = mha(tgt, xs, p['wq_i'], p['bq_i'], p['wk_i'], p['bk_i'],
                   p['wv_i'], p['bv_i'], p['wo_i'], p['bo_i'])
        tgt = ln(tgt + o, p['lni'][0:1], p['lni'][1:2])
        ff = jnp.maximum(tgt @ p['w1'] + p['b1'], 0.0) @ p['w2'] + p['b2']
        tgt = ln(tgt + ff, p['lni'][2:3], p['lni'][3:4])
        o, attn = mha(tgt, xs, p['wq_e'], p['bq_e'], p['wk_e'], p['bk_e'],
                      p['wv_e'], p['bv_e'], p['wo_e'], p['bo_e'])
        tgt = ln(tgt + o, p['lne'][0:1], p['lne'][1:2])
        feats.append(tgt[0])
        attns.append(jnp.mean(attn, axis=-1))
    return jnp.stack(feats, axis=0), jnp.stack(attns, axis=0)


# ------------------------- main -------------------------

if __name__ == "__main__":
    key = jax.random.PRNGKey(0)
    kx, kparam = jax.random.split(key)

    x = jax.random.normal(kx, (G * N, D), dtype=jnp.float32)               # (16, 32)
    # interleaved group ids (host-side) to exercise the in-kernel permutation gather
    batch_index = np.tile(np.arange(G, dtype=np.int32), N)                  # (16,)

    params = init_params(kparam)
    kernel_params = pack_kernel_params(params, batch_index, G)              # one-time packing

    feats, attns = cross_attention_forward(x, kernel_params, num_groups=G)
    feats = jax.block_until_ready(feats)
    attns = jax.block_until_ready(attns)

    ref_feats, ref_attns = reference_forward(x, jnp.asarray(batch_index), params, G)
    assert feats.shape == (G, D) and attns.shape == (G, N)
    assert jnp.allclose(feats, ref_feats, atol=1e-4, rtol=1e-4)
    assert jnp.allclose(attns, ref_attns, atol=1e-4, rtol=1e-4)

    print("KERNEL_OK")
</pallas_src>

<mosaic_0001>
module attributes {stable_mosaic.version = 11 : i64} {
  func.func @cross_attn_kernel(%arg0: memref<16x32xf32, #tpu.memory_space<vmem>>, %arg1: memref<16x16xf32, #tpu.memory_space<vmem>>, %arg2: memref<4x32x32xf32, #tpu.memory_space<vmem>>, %arg3: memref<5x32x32xf32, #tpu.memory_space<vmem>>, %arg4: memref<32x128xf32, #tpu.memory_space<vmem>>, %arg5: memref<128x32xf32, #tpu.memory_space<vmem>>, %arg6: memref<57x128xf32, #tpu.memory_space<vmem>>, %arg7: memref<2x128xf32, #tpu.memory_space<vmem>>) attributes {dimension_semantics = [], scalar_prefetch = 0 : i64, scratch_operands = 0 : i64, tpu.core_type = #tpu.core_type<tc>} {
    %c0 = arith.constant 0 : index
    %c0_0 = arith.constant 0 : index
    %0 = vector.load %arg1[%c0, %c0_0] : memref<16x16xf32, #tpu.memory_space<vmem>>, vector<16x16xf32>
    %c0_1 = arith.constant 0 : index
    %c0_2 = arith.constant 0 : index
    %1 = vector.load %arg0[%c0_1, %c0_2] : memref<16x32xf32, #tpu.memory_space<vmem>>, vector<16x32xf32>
    %cst = arith.constant dense<0.000000e+00> : vector<16x32xf32>
    %2 = tpu.matmul %0, %1, %cst {dimension_numbers = #tpu.dot_dimension_numbers<[1], [0], [0], [1], [0, 0, 1, 1], [], []>} : vector<16x16xf32>, vector<16x32xf32>, vector<16x32xf32> -> vector<16x32xf32>
    %c0_3 = arith.constant 0 : index
    %c0_4 = arith.constant 0 : index
    %c0_5 = arith.constant 0 : index
    %3 = vector.load %arg2[%c0_3, %c0_4, %c0_5] : memref<4x32x32xf32, #tpu.memory_space<vmem>>, vector<1x32x32xf32>
    %4 = vector.shape_cast %3 : vector<1x32x32xf32> to vector<32x32xf32>
    %cst_6 = arith.constant dense<0.000000e+00> : vector<16x32xf32>
    %5 = tpu.matmul %2, %4, %cst_6 {dimension_numbers = #tpu.dot_dimension_numbers<[1], [0], [0], [1], [0, 0, 1, 1], [], []>} : vector<16x32xf32>, vector<32x32xf32>, vector<16x32xf32> -> vector<16x32xf32>
    %c42 = arith.constant 42 : index
    %c0_7 = arith.constant 0 : index
    %6 = vector.load %arg6[%c42, %c0_7] : memref<57x128xf32, #tpu.memory_space<vmem>>, vector<1x32xf32>
    %7 = vector.broadcast %6 : vector<1x32xf32> to vector<16x32xf32>
    %8 = arith.addf %5, %7 : vector<16x32xf32>
    %9 = vector.shape_cast %8 : vector<16x32xf32> to vector<2x8x32xf32>
    %c1 = arith.constant 1 : index
    %c0_8 = arith.constant 0 : index
    %c0_9 = arith.constant 0 : index
    %10 = vector.load %arg2[%c1, %c0_8, %c0_9] : memref<4x32x32xf32, #tpu.memory_space<vmem>>, vector<1x32x32xf32>
    %11 = vector.shape_cast %10 : vector<1x32x32xf32> to vector<32x32xf32>
    %cst_10 = arith.constant dense<0.000000e+00> : vector<16x32xf32>
    %12 = tpu.matmul %2, %11, %cst_10 {dimension_numbers = #tpu.dot_dimension_numbers<[1], [0], [0], [1], [0, 0, 1, 1], [], []>} : vector<16x32xf32>, vector<32x32xf32>, vector<16x32xf32> -> vector<16x32xf32>
    %c43 = arith.constant 43 : index
    %c0_11 = arith.constant 0 : index
    %13 = vector.load %arg6[%c43, %c0_11] : memref<57x128xf32, #tpu.memory_space<vmem>>, vector<1x32xf32>
    %14 = vector.broadcast %13 : vector<1x32xf32> to vector<16x32xf32>
    %15 = arith.addf %12, %14 : vector<16x32xf32>
    %16 = vector.shape_cast %15 : vector<16x32xf32> to vector<2x8x32xf32>
    %c2 = arith.constant 2 : index
    %c0_12 = arith.constant 0 : index
    %c0_13 = arith.constant 0 : index
    %17 = vector.load %arg2[%c2, %c0_12, %c0_13] : memref<4x32x32xf32, #tpu.memory_space<vmem>>, vector<1x32x32xf32>
    %18 = vector.shape_cast %17 : vector<1x32x32xf32> to vector<32x32xf32>
    %cst_14 = arith.constant dense<0.000000e+00> : vector<16x32xf32>
    %19 = tpu.matmul %2, %18, %cst_14 {dimension_numbers = #tpu.dot_dimension_numbers<[1], [0], [0], [1], [0, 0, 1, 1], [], []>} : vector<16x32xf32>, vector<32x32xf32>, vector<16x32xf32> -> vector<16x32xf32>
    %c44 = arith.constant 44 : index
    %c0_15 = arith.constant 0 : index
    %20 = vector.load %arg6[%c44, %c0_15] : memref<57x128xf32, #tpu.memory_space<vmem>>, vector<1x32xf32>
    %21 = vector.broadcast %20 : vector<1x32xf32> to vector<16x32xf32>
    %22 = arith.addf %19, %21 : vector<16x32xf32>
    %23 = vector.shape_cast %22 : vector<16x32xf32> to vector<2x8x32xf32>
    %c3 = arith.constant 3 : index
    %c0_16 = arith.constant 0 : index
    %c0_17 = arith.constant 0 : index
    %24 = vector.load %arg2[%c3, %c0_16, %c0_17] : memref<4x32x32xf32, #tpu.memory_space<vmem>>, vector<1x32x32xf32>
    %25 = vector.shape_cast %24 : vector<1x32x32xf32> to vector<32x32xf32>
    %cst_18 = arith.constant dense<0.000000e+00> : vector<16x32xf32>
    %26 = tpu.matmul %2, %25, %cst_18 {dimension_numbers = #tpu.dot_dimension_numbers<[1], [0], [0], [1], [0, 0, 1, 1], [], []>} : vector<16x32xf32>, vector<32x32xf32>, vector<16x32xf32> -> vector<16x32xf32>
    %c45 = arith.constant 45 : index
    %c0_19 = arith.constant 0 : index
    %27 = vector.load %arg6[%c45, %c0_19] : memref<57x128xf32, #tpu.memory_space<vmem>>, vector<1x32xf32>
    %28 = vector.broadcast %27 : vector<1x32xf32> to vector<16x32xf32>
    %29 = arith.addf %26, %28 : vector<16x32xf32>
    %30 = vector.shape_cast %29 : vector<16x32xf32> to vector<2x8x32xf32>
    %c3_20 = arith.constant 3 : index
    %c0_21 = arith.constant 0 : index
    %c0_22 = arith.constant 0 : index
    %31 = vector.load %arg3[%c3_20, %c0_21, %c0_22] : memref<5x32x32xf32, #tpu.memory_space<vmem>>, vector<1x32x32xf32>
    %32 = vector.shape_cast %31 : vector<1x32x32xf32> to vector<32x32xf32>
    %c4 = arith.constant 4 : index
    %c0_23 = arith.constant 0 : index
    %c0_24 = arith.constant 0 : index
    %33 = vector.load %arg3[%c4, %c0_23, %c0_24] : memref<5x32x32xf32, #tpu.memory_space<vmem>>, vector<1x32x32xf32>
    %34 = vector.shape_cast %33 : vector<1x32x32xf32> to vector<32x32xf32>
    %c40 = arith.constant 40 : index
    %c0_25 = arith.constant 0 : index
    %35 = vector.load %arg6[%c40, %c0_25] : memref<57x128xf32, #tpu.memory_space<vmem>>, vector<1x32xf32>
    %c41 = arith.constant 41 : index
    %c0_26 = arith.constant 0 : index
    %36 = vector.load %arg6[%c41, %c0_26] : memref<57x128xf32, #tpu.memory_space<vmem>>, vector<1x32xf32>
    %37 = vector.shape_cast %36 : vector<1x32xf32> to vector<1x1x32xf32>
    %38 = vector.broadcast %37 : vector<1x1x32xf32> to vector<2x8x32xf32>
    %39 = arith.mulf %9, %38 : vector<2x8x32xf32>
    %40 = vector.shape_cast %39 : vector<2x8x32xf32> to vector<16x32xf32>
    %cst_27 = arith.constant dense<0.000000e+00> : vector<16x32xf32>
    %41 = tpu.matmul %40, %32, %cst_27 {dimension_numbers = #tpu.dot_dimension_numbers<[1], [0], [0], [1], [0, 0, 1, 1], [], []>} : vector<16x32xf32>, vector<32x32xf32>, vector<16x32xf32> -> vector<16x32xf32>
    %42 = vector.shape_cast %41 : vector<16x32xf32> to vector<2x8x32xf32>
    %cst_28 = arith.constant dense<0xFF800000> : vector<2x32xf32>
    %43 = vector.multi_reduction <maximumf>, %42, %cst_28 [1] : vector<2x8x32xf32> to vector<2x32xf32>
    %44 = vector.shape_cast %43 : vector<2x32xf32> to vector<2x1x32xf32>
    %45 = vector.broadcast %44 : vector<2x1x32xf32> to vector<2x8x32xf32>
    %46 = arith.subf %42, %45 : vector<2x8x32xf32>
    %47 = math.exp %46 : vector<2x8x32xf32>
    %cst_29 = arith.constant dense<0.000000e+00> : vector<2x32xf32>
    %48 = vector.multi_reduction <add>, %47, %cst_29 [1] : vector<2x8x32xf32> to vector<2x32xf32>
    %49 = vector.shape_cast %48 : vector<2x32xf32> to vector<2x1x32xf32>
    %50 = vector.broadcast %49 : vector<2x1x32xf32> to vector<2x8x32xf32>
    %51 = arith.divf %47, %50 : vector<2x8x32xf32>
    %52 = vector.shape_cast %51 : vector<2x8x32xf32> to vector<16x32xf32>
    %cst_30 = arith.constant dense<0.000000e+00> : vector<16x32xf32>
    %53 = tpu.matmul %52, %34, %cst_30 {dimension_numbers = #tpu.dot_dimension_numbers<[1], [0], [0], [1], [0, 0, 1, 1], [], []>} : vector<16x32xf32>, vector<32x32xf32>, vector<16x32xf32> -> vector<16x32xf32>
    %54 = vector.shape_cast %53 : vector<16x32xf32> to vector<2x8x32xf32>
    %55 = arith.mulf %54, %16 : vector<2x8x32xf32>
    %cst_31 = arith.constant dense<0.000000e+00> : vector<2x32xf32>
    %56 = vector.multi_reduction <add>, %55, %cst_31 [1] : vector<2x8x32xf32> to vector<2x32xf32>
    %c0_32 = arith.constant 0 : index
    %c0_33 = arith.constant 0 : index
    %c0_34 = arith.constant 0 : index
    %57 = vector.load %arg3[%c0_32, %c0_33, %c0_34] : memref<5x32x32xf32, #tpu.memory_space<vmem>>, vector<1x32x32xf32>
    %58 = vector.shape_cast %57 : vector<1x32x32xf32> to vector<32x32xf32>
    %cst_35 = arith.constant dense<0.000000e+00> : vector<2x32xf32>
    %59 = tpu.matmul %56, %58, %cst_35 {dimension_numbers = #tpu.dot_dimension_numbers<[1], [0], [0], [1], [0, 0, 1, 1], [], []>} : vector<2x32xf32>, vector<32x32xf32>, vector<2x32xf32> -> vector<2x32xf32>
    %c46 = arith.constant 46 : index
    %c0_36 = arith.constant 0 : index
    %60 = vector.load %arg6[%c46, %c0_36] : memref<57x128xf32, #tpu.memory_space<vmem>>, vector<1x32xf32>
    %61 = vector.broadcast %60 : vector<1x32xf32> to vector<2x32xf32>
    %62 = arith.addf %59, %61 : vector<2x32xf32>
    %63 = vector.broadcast %35 : vector<1x32xf32> to vector<2x32xf32>
    %64 = arith.addf %63, %62 : vector<2x32xf32>
    %c50 = arith.constant 50 : index
    %c0_37 = arith.constant 0 : index
    %65 = vector.load %arg6[%c50, %c0_37] : memref<57x128xf32, #tpu.memory_space<vmem>>, vector<1x32xf32>
    %c51 = arith.constant 51 : index
    %c0_38 = arith.constant 0 : index
    %66 = vector.load %arg6[%c51, %c0_38] : memref<57x128xf32, #tpu.memory_space<vmem>>, vector<1x32xf32>
    %cst_39 = arith.constant dense<0.000000e+00> : vector<2xf32>
    %67 = vector.multi_reduction <add>, %64, %cst_39 [1] : vector<2x32xf32> to vector<2xf32>
    %68 = vector.shape_cast %67 : vector<2xf32> to vector<2x1xf32>
    %cst_40 = arith.constant 3.200000e+01 : f32
    %69 = vector.broadcast %cst_40 : f32 to vector<2x1xf32>
    %70 = arith.divf %68, %69 : vector<2x1xf32>
    %71 = vector.broadcast %70 : vector<2x1xf32> to vector<2x32xf32>
    %72 = arith.subf %64, %71 : vector<2x32xf32>
    %73 = arith.mulf %72, %72 : vector<2x32xf32>
    %cst_41 = arith.constant dense<0.000000e+00> : vector<2xf32>
    %74 = vector.multi_reduction <add>, %73, %cst_41 [1] : vector<2x32xf32> to vector<2xf32>
    %75 = vector.shape_cast %74 : vector<2xf32> to vector<2x1xf32>
    %cst_42 = arith.constant 3.200000e+01 : f32
    %76 = vector.broadcast %cst_42 : f32 to vector<2x1xf32>
    %77 = arith.divf %75, %76 : vector<2x1xf32>
    %78 = vector.broadcast %70 : vector<2x1xf32> to vector<2x32xf32>
    %79 = arith.subf %64, %78 : vector<2x32xf32>
    %cst_43 = arith.constant 9.99999974E-6 : f32
    %80 = vector.broadcast %cst_43 : f32 to vector<2x1xf32>
    %81 = arith.addf %77, %80 : vector<2x1xf32>
    %82 = math.rsqrt %81 : vector<2x1xf32>
    %83 = vector.broadcast %82 : vector<2x1xf32> to vector<2x32xf32>
    %84 = arith.mulf %79, %83 : vector<2x32xf32>
    %85 = vector.broadcast %65 : vector<1x32xf32> to vector<2x32xf32>
    %86 = arith.mulf %84, %85 : vector<2x32xf32>
    %87 = vector.broadcast %66 : vector<1x32xf32> to vector<2x32xf32>
    %88 = arith.addf %86, %87 : vector<2x32xf32>
    %c0_44 = arith.constant 0 : index
    %c0_45 = arith.constant 0 : index
    %89 = vector.load %arg4[%c0_44, %c0_45] : memref<32x128xf32, #tpu.memory_space<vmem>>, vector<32x128xf32>
    %cst_46 = arith.constant dense<0.000000e+00> : vector<2x128xf32>
    %90 = tpu.matmul %88, %89, %cst_46 {dimension_numbers = #tpu.dot_dimension_numbers<[1], [0], [0], [1], [0, 0, 1, 1], [], []>} : vector<2x32xf32>, vector<32x128xf32>, vector<2x128xf32> -> vector<2x128xf32>
    %c56 = arith.constant 56 : index
    %c0_47 = arith.constant 0 : index
    %91 = vector.load %arg6[%c56, %c0_47] : memref<57x128xf32, #tpu.memory_space<vmem>>, vector<1x128xf32>
    %92 = vector.broadcast %91 : vector<1x128xf32> to vector<2x128xf32>
    %93 = arith.addf %90, %92 : vector<2x128xf32>
    %cst_48 = arith.constant 0.000000e+00 : f32
    %94 = vector.broadcast %cst_48 : f32 to vector<2x128xf32>
    %95 = arith.maximumf %93, %94 : vector<2x128xf32>
    %c0_49 = arith.constant 0 : index
    %c0_50 = arith.constant 0 : index
    %96 = vector.load %arg5[%c0_49, %c0_50] : memref<128x32xf32, #tpu.memory_space<vmem>>, vector<128x32xf32>
    %cst_51 = arith.constant dense<0.000000e+00> : vector<2x32xf32>
    %97 = tpu.matmul %95, %96, %cst_51 {dimension_numbers = #tpu.dot_dimension_numbers<[1], [0], [0], [1], [0, 0, 1, 1], [], []>} : vector<2x128xf32>, vector<128x32xf32>, vector<2x32xf32> -> vector<2x32xf32>
    %c49 = arith.constant 49 : index
    %c0_52 = arith.constant 0 : index
    %98 = vector.load %arg6[%c49, %c0_52] : memref<57x128xf32, #tpu.memory_space<vmem>>, vector<1x32xf32>
    %99 = vector.broadcast %98 : vector<1x32xf32> to vector<2x32xf32>
    %100 = arith.addf %97, %99 : vector<2x32xf32>
    %101 = arith.addf %88, %100 : vector<2x32xf32>
    %c52 = arith.constant 52 : index
    %c0_53 = arith.constant 0 : index
    %102 = vector.load %arg6[%c52, %c0_53] : memref<57x128xf32, #tpu.memory_space<vmem>>, vector<1x32xf32>
    %c53 = arith.constant 53 : index
    %c0_54 = arith.constant 0 : index
    %103 = vector.load %arg6[%c53, %c0_54] : memref<57x128xf32, #tpu.memory_space<vmem>>, vector<1x32xf32>
    %cst_55 = arith.constant dense<0.000000e+00> : vector<2xf32>
    %104 = vector.multi_reduction <add>, %101, %cst_55 [1] : vector<2x32xf32> to vector<2xf32>
    %105 = vector.shape_cast %104 : vector<2xf32> to vector<2x1xf32>
    %cst_56 = arith.constant 3.200000e+01 : f32
    %106 = vector.broadcast %cst_56 : f32 to vector<2x1xf32>
    %107 = arith.divf %105, %106 : vector<2x1xf32>
    %108 = vector.broadcast %107 : vector<2x1xf32> to vector<2x32xf32>
    %109 = arith.subf %101, %108 : vector<2x32xf32>
    %110 = arith.mulf %109, %109 : vector<2x32xf32>
    %cst_57 = arith.constant dense<0.000000e+00> : vector<2xf32>
    %111 = vector.multi_reduction <add>, %110, %cst_57 [1] : vector<2x32xf32> to vector<2xf32>
    %112 = vector.shape_cast %111 : vector<2xf32> to vector<2x1xf32>
    %cst_58 = arith.constant 3.200000e+01 : f32
    %113 = vector.broadcast %cst_58 : f32 to vector<2x1xf32>
    %114 = arith.divf %112, %113 : vector<2x1xf32>
    %115 = vector.broadcast %107 : vector<2x1xf32> to vector<2x32xf32>
    %116 = arith.subf %101, %115 : vector<2x32xf32>
    %cst_59 = arith.constant 9.99999974E-6 : f32
    %117 = vector.broadcast %cst_59 : f32 to vector<2x1xf32>
    %118 = arith.addf %114, %117 : vector<2x1xf32>
    %119 = math.rsqrt %118 : vector<2x1xf32>
    %120 = vector.broadcast %119 : vector<2x1xf32> to vector<2x32xf32>
    %121 = arith.mulf %116, %120 : vector<2x32xf32>
    %122 = vector.broadcast %102 : vector<1x32xf32> to vector<2x32xf32>
    %123 = arith.mulf %121, %122 : vector<2x32xf32>
    %124 = vector.broadcast %103 : vector<1x32xf32> to vector<2x32xf32>
    %125 = arith.addf %123, %124 : vector<2x32xf32>
    %c1_60 = arith.constant 1 : index
    %c0_61 = arith.constant 0 : index
    %c0_62 = arith.constant 0 : index
    %126 = vector.load %arg3[%c1_60, %c0_61, %c0_62] : memref<5x32x32xf32, #tpu.memory_space<vmem>>, vector<1x32x32xf32>
    %127 = vector.shape_cast %126 : vector<1x32x32xf32> to vector<32x32xf32>
    %cst_63 = arith.constant dense<0.000000e+00> : vector<2x32xf32>
    %128 = tpu.matmul %125, %127, %cst_63 {dimension_numbers = #tpu.dot_dimension_numbers<[1], [0], [0], [1], [0, 0, 1, 1], [], []>} : vector<2x32xf32>, vector<32x32xf32>, vector<2x32xf32> -> vector<2x32xf32>
    %c47 = arith.constant 47 : index
    %c0_64 = arith.constant 0 : index
    %129 = vector.load %arg6[%c47, %c0_64] : memref<57x128xf32, #tpu.memory_space<vmem>>, vector<1x32xf32>
    %130 = vector.broadcast %129 : vector<1x32xf32> to vector<2x32xf32>
    %131 = arith.addf %128, %130 : vector<2x32xf32>
    %132 = vector.shape_cast %131 : vector<2x32xf32> to vector<2x1x32xf32>
    %133 = vector.broadcast %132 : vector<2x1x32xf32> to vector<2x8x32xf32>
    %134 = arith.mulf %23, %133 : vector<2x8x32xf32>
    %135 = vector.shape_cast %134 : vector<2x8x32xf32> to vector<16x32xf32>
    %cst_65 = arith.constant dense<0.000000e+00> : vector<16x32xf32>
    %136 = tpu.matmul %135, %32, %cst_65 {dimension_numbers = #tpu.dot_dimension_numbers<[1], [0], [0], [1], [0, 0, 1, 1], [], []>} : vector<16x32xf32>, vector<32x32xf32>, vector<16x32xf32> -> vector<16x32xf32>
    %137 = vector.shape_cast %136 : vector<16x32xf32> to vector<2x8x32xf32>
    %cst_66 = arith.constant dense<0xFF800000> : vector<2x32xf32>
    %138 = vector.multi_reduction <maximumf>, %137, %cst_66 [1] : vector<2x8x32xf32> to vector<2x32xf32>
    %139 = vector.shape_cast %138 : vector<2x32xf32> to vector<2x1x32xf32>
    %140 = vector.broadcast %139 : vector<2x1x32xf32> to vector<2x8x32xf32>
    %141 = arith.subf %137, %140 : vector<2x8x32xf32>
    %142 = math.exp %141 : vector<2x8x32xf32>
    %cst_67 = arith.constant dense<0.000000e+00> : vector<2x32xf32>
    %143 = vector.multi_reduction <add>, %142, %cst_67 [1] : vector<2x8x32xf32> to vector<2x32xf32>
    %144 = vector.shape_cast %143 : vector<2x32xf32> to vector<2x1x32xf32>
    %145 = vector.broadcast %144 : vector<2x1x32xf32> to vector<2x8x32xf32>
    %146 = arith.divf %142, %145 : vector<2x8x32xf32>
    %147 = vector.shape_cast %146 : vector<2x8x32xf32> to vector<16x32xf32>
    %cst_68 = arith.constant dense<0.000000e+00> : vector<16x32xf32>
    %148 = tpu.matmul %147, %34, %cst_68 {dimension_numbers = #tpu.dot_dimension_numbers<[1], [0], [0], [1], [0, 0, 1, 1], [], []>} : vector<16x32xf32>, vector<32x32xf32>, vector<16x32xf32> -> vector<16x32xf32>
    %149 = vector.shape_cast %148 : vector<16x32xf32> to vector<2x8x32xf32>
    %150 = arith.mulf %149, %30 : vector<2x8x32xf32>
    %cst_69 = arith.constant dense<0.000000e+00> : vector<2x32xf32>
    %151 = vector.multi_reduction <add>, %150, %cst_69 [1] : vector<2x8x32xf32> to vector<2x32xf32>
    %c2_70 = arith.constant 2 : index
    %c0_71 = arith.constant 0 : index
    %c0_72 = arith.constant 0 : index
    %152 = vector.load %arg3[%c2_70, %c0_71, %c0_72] : memref<5x32x32xf32, #tpu.memory_space<vmem>>, vector<1x32x32xf32>
    %153 = vector.shape_cast %152 : vector<1x32x32xf32> to vector<32x32xf32>
    %cst_73 = arith.constant dense<0.000000e+00> : vector<2x32xf32>
    %154 = tpu.matmul %151, %153, %cst_73 {dimension_numbers = #tpu.dot_dimension_numbers<[1], [0], [0], [1], [0, 0, 1, 1], [], []>} : vector<2x32xf32>, vector<32x32xf32>, vector<2x32xf32> -> vector<2x32xf32>
    %c48 = arith.constant 48 : index
    %c0_74 = arith.constant 0 : index
    %155 = vector.load %arg6[%c48, %c0_74] : memref<57x128xf32, #tpu.memory_space<vmem>>, vector<1x32xf32>
    %156 = vector.broadcast %155 : vector<1x32xf32> to vector<2x32xf32>
    %157 = arith.addf %154, %156 : vector<2x32xf32>
    %158 = arith.addf %125, %157 : vector<2x32xf32>
    %c54 = arith.constant 54 : index
    %c0_75 = arith.constant 0 : index
    %159 = vector.load %arg6[%c54, %c0_75] : memref<57x128xf32, #tpu.memory_space<vmem>>, vector<1x32xf32>
    %c55 = arith.constant 55 : index
    %c0_76 = arith.constant 0 : index
    %160 = vector.load %arg6[%c55, %c0_76] : memref<57x128xf32, #tpu.memory_space<vmem>>, vector<1x32xf32>
    %cst_77 = arith.constant dense<0.000000e+00> : vector<2xf32>
    %161 = vector.multi_reduction <add>, %158, %cst_77 [1] : vector<2x32xf32> to vector<2xf32>
    %162 = vector.shape_cast %161 : vector<2xf32> to vector<2x1xf32>
    %cst_78 = arith.constant 3.200000e+01 : f32
    %163 = vector.broadcast %cst_78 : f32 to vector<2x1xf32>
    %164 = arith.divf %162, %163 : vector<2x1xf32>
    %165 = vector.broadcast %164 : vector<2x1xf32> to vector<2x32xf32>
    %166 = arith.subf %158, %165 : vector<2x32xf32>
    %167 = arith.mulf %166, %166 : vector<2x32xf32>
    %cst_79 = arith.constant dense<0.000000e+00> : vector<2xf32>
    %168 = vector.multi_reduction <add>, %167, %cst_79 [1] : vector<2x32xf32> to vector<2xf32>
    %169 = vector.shape_cast %168 : vector<2xf32> to vector<2x1xf32>
    %cst_80 = arith.constant 3.200000e+01 : f32
    %170 = vector.broadcast %cst_80 : f32 to vector<2x1xf32>
    %171 = arith.divf %169, %170 : vector<2x1xf32>
    %172 = vector.broadcast %164 : vector<2x1xf32> to vector<2x32xf32>
    %173 = arith.subf %158, %172 : vector<2x32xf32>
    %cst_81 = arith.constant 9.99999974E-6 : f32
    %174 = vector.broadcast %cst_81 : f32 to vector<2x1xf32>
    %175 = arith.addf %171, %174 : vector<2x1xf32>
    %176 = math.rsqrt %175 : vector<2x1xf32>
    %177 = vector.broadcast %176 : vector<2x1xf32> to vector<2x32xf32>
    %178 = arith.mulf %173, %177 : vector<2x32xf32>
    %179 = vector.broadcast %159 : vector<1x32xf32> to vector<2x32xf32>
    %180 = arith.mulf %178, %179 : vector<2x32xf32>
    %181 = vector.broadcast %160 : vector<1x32xf32> to vector<2x32xf32>
    %182 = arith.addf %180, %181 : vector<2x32xf32>
    %183 = vector.extract_strided_slice %146 {offsets = [0, 0, 0], sizes = [2, 8, 4], strides = [1, 1, 1]} : vector<2x8x32xf32> to vector<2x8x4xf32>
    %cst_82 = arith.constant dense<0.000000e+00> : vector<2x8xf32>
    %184 = vector.multi_reduction <add>, %183, %cst_82 [2] : vector<2x8x4xf32> to vector<2x8xf32>
    %cst_83 = arith.constant 4.000000e+00 : f32
    %185 = vector.broadcast %cst_83 : f32 to vector<2x8xf32>
    %186 = arith.divf %184, %185 : vector<2x8xf32>
    %c0_84 = arith.constant 0 : index
    %c0_85 = arith.constant 0 : index
    %187 = vector.load %arg6[%c0_84, %c0_85] : memref<57x128xf32, #tpu.memory_space<vmem>>, vector<32x128xf32>
    %c32 = arith.constant 32 : index
    %c0_86 = arith.constant 0 : index
    %188 = vector.load %arg6[%c32, %c0_86] : memref<57x128xf32, #tpu.memory_space<vmem>>, vector<8x128xf32>
    %cst_87 = arith.constant dense<0.000000e+00> : vector<2x128xf32>
    %189 = tpu.matmul %182, %187, %cst_87 {dimension_numbers = #tpu.dot_dimension_numbers<[1], [0], [0], [1], [0, 0, 1, 1], [], []>} : vector<2x32xf32>, vector<32x128xf32>, vector<2x128xf32> -> vector<2x128xf32>
    %cst_88 = arith.constant dense<0.000000e+00> : vector<2x128xf32>
    %190 = tpu.matmul %186, %188, %cst_88 {dimension_numbers = #tpu.dot_dimension_numbers<[1], [0], [0], [1], [0, 0, 1, 1], [], []>} : vector<2x8xf32>, vector<8x128xf32>, vector<2x128xf32> -> vector<2x128xf32>
    %191 = arith.addf %189, %190 : vector<2x128xf32>
    %c0_89 = arith.constant 0 : index
    %c0_90 = arith.constant 0 : index
    %192 = vector.load %arg7[%c0_89, %c0_90] : memref<2x128xf32, #tpu.memory_space<vmem>>, vector<2x128xf32>
    tpu.vector_store %arg7[%c0_89, %c0_90], %191 {strides = array<i32>} : memref<2x128xf32, #tpu.memory_space<vmem>>, vector<2x128xf32>,
    return
  }
}

</mosaic_0001>

<llo_original>
// kernel: _forward_jit.1
$region0: #{_forward_jit.1}
  #allocation0 [shape = 'u32[]', space=smem, size = 0x4, offset = 0x4, fixed_abs, tag = 'smem constant byte address 0x4 - core index']
  #allocation1 [shape = 'u32[72,128]{1,0:T(1,128)}', space=vmem, size = 0x9000, scoped, tag = 'internal scratch']
  %s0 = inlined_call_operand.hbm [shape: f32[16,32], index: 0, kind: input, shape index: {}]
  %s1 = inlined_call_operand.hbm [shape: f32[16,16], index: 1, kind: input, shape index: {}]
  %s2 = inlined_call_operand.hbm [shape: f32[4,32,32], index: 2, kind: input, shape index: {}]
  %s3 = inlined_call_operand.vmem [shape: f32[5,32,32], index: 3, kind: input, shape index: {}]
  %s4 = inlined_call_operand.hbm [shape: f32[32,128], index: 4, kind: input, shape index: {}]
  %s5 = inlined_call_operand.vmem [shape: f32[128,32], index: 5, kind: input, shape index: {}]
  %s6 = inlined_call_operand.hbm [shape: f32[57,128], index: 6, kind: input, shape index: {}]
  %s7 = inlined_call_operand.vmem [shape: f32[2,128], index: 7, kind: output, shape index: {}]
  %s8 = sld [smem:[#allocation0]]
  $region58: #{_forward_jit.1} parent=0
    _
  %s10 = ssub.s32 1, %s8
  %s11 = scalar_select 0, %s10, %s8
  $region1: #{_forward_jit.1} parent=0
    #allocation2 [shape = 'u8[8192]{0}', space=vmem, size = 0x2000, scoped, tag = 'input window, operand 0, single buffered']
    #allocation3 [shape = 's32[1]{0}', space=sflag, size = 0x4, scoped, tag = 'scoped memory for _forward_jit.1']
    #allocation4 [shape = 'u8[8192]{0}', space=vmem, size = 0x2000, scoped, tag = 'input window, operand 1, single buffered']
    #allocation5 [shape = 's32[1]{0}', space=sflag, size = 0x4, scoped, tag = 'scoped memory for _forward_jit.1']
    #allocation6 [shape = 'u8[65536]{0}', space=vmem, size = 0x10000, scoped, tag = 'input window, operand 2, single buffered']
    #allocation7 [shape = 'u8[16384]{0}', space=vmem, size = 0x4000, scoped, tag = 'input window, operand 4, single buffered']
    #allocation8 [shape = 's32[1]{0}', space=sflag, size = 0x4, scoped, tag = 'scoped memory for _forward_jit.1']
    #allocation9 [shape = 'u8[32768]{0}', space=vmem, size = 0x8000, scoped, tag = 'input window, operand 6, single buffered']
    %12 = vsyncpa [#allocation3], 0
    %13 = vsyncpa [#allocation5], 0
    %14 = vsyncpa [#allocation8], 0
    // Predicated region
    $region2: #{_forward_jit.1} parent=1 // pred_check
      _
    $region3: #{_forward_jit.1} parent=1 // pred_check_branch
      %16 = sbr.rel (0) target = $region5
    $region4: #{_forward_jit.1} parent=1 // pred_region
      %18 = vsyncadd [#allocation3], 0
      %s19 = sshll.u32 %s0, 4
      %s20 = int_to_ptr.hbm [resolvable:$true] %s19
      %s21 = sshll.u32 [#allocation2], 4
      %s22 = int_to_ptr.vmem [resolvable:$true] %s21
      %27 = dma.hbm_to_vmem [thread:$0]  %s20, 256, %s22, [#allocation3], 128, 128, 8
    $region5: #{_forward_jit.1} parent=1 // pred_fallthru
      _
    // Predicated region
    $region6: #{_forward_jit.1} parent=1 // pred_check
      _
    $region7: #{_forward_jit.1} parent=1 // pred_check_branch
      %29 = sbr.rel (0) target = $region9
    $region8: #{_forward_jit.1} parent=1 // pred_region
      %31 = vsyncadd [#allocation5], 0
      %s32 = sshll.u32 %s1, 4
      %s33 = int_to_ptr.hbm [resolvable:$true] %s32
      %s34 = sshll.u32 [#allocation4], 4
      %s35 = int_to_ptr.vmem [resolvable:$true] %s34
      %40 = dma.hbm_to_vmem [thread:$0]  %s33, 256, %s35, [#allocation5], 128, 128, 8
    $region9: #{_forward_jit.1} parent=1 // pred_fallthru
      _
    // Predicated region
    $region10: #{_forward_jit.1} parent=1 // pred_check
      _
    $region11: #{_forward_jit.1} parent=1 // pred_check_branch
      %42 = sbr.rel (0) target = $region13
    $region12: #{_forward_jit.1} parent=1 // pred_region
      %44 = vsyncadd [#allocation5], 0
      %s45 = sshll.u32 %s2, 4
      %s46 = int_to_ptr.hbm [resolvable:$true] %s45
      %s47 = sshll.u32 [#allocation6], 4
      %s48 = int_to_ptr.vmem [resolvable:$true] %s47
      %53 = dma.hbm_to_vmem [thread:$0]  %s46, 2048, %s48, [#allocation5], 128, 128, 8
    $region13: #{_forward_jit.1} parent=1 // pred_fallthru
      _
    // Predicated region
    $region14: #{_forward_jit.1} parent=1 // pred_check
      _
    $region15: #{_forward_jit.1} parent=1 // pred_check_branch
      %55 = sbr.rel (0) target = $region17
    $region16: #{_forward_jit.1} parent=1 // pred_region
      _
    $region17: #{_forward_jit.1} parent=1 // pred_fallthru
      _
    // Predicated region
    $region18: #{_forward_jit.1} parent=1 // pred_check
      _
    $region19: #{_forward_jit.1} parent=1 // pred_check_branch
      %57 = sbr.rel (0) target = $region21
    $region20: #{_forward_jit.1} parent=1 // pred_region
      %59 = vsyncadd [#allocation8], 0
      %s60 = sshll.u32 %s4, 4
      %s61 = int_to_ptr.hbm [resolvable:$true] %s60
      %s62 = sshll.u32 [#allocation7], 4
      %s63 = int_to_ptr.vmem [resolvable:$true] %s62
      %68 = dma.hbm_to_vmem [thread:$0]  %s61, 512, %s63, [#allocation8], 128, 128, 8
    $region21: #{_forward_jit.1} parent=1 // pred_fallthru
      _
    // Predicated region
    $region22: #{_forward_jit.1} parent=1 // pred_check
      _
    $region23: #{_forward_jit.1} parent=1 // pred_check_branch
      %70 = sbr.rel (0) target = $region25
    $region24: #{_forward_jit.1} parent=1 // pred_region
      _
    $region25: #{_forward_jit.1} parent=1 // pred_fallthru
      _
    // Predicated region
    $region26: #{_forward_jit.1} parent=1 // pred_check
      _
    $region27: #{_forward_jit.1} parent=1 // pred_check_branch
      %72 = sbr.rel (0) target = $region29
    $region28: #{_forward_jit.1} parent=1 // pred_region
      %74 = vsyncadd [#allocation8], 0
      %s75 = sshll.u32 %s6, 4
      %s76 = int_to_ptr.hbm [resolvable:$true] %s75
      %s77 = sshll.u32 [#allocation9], 4
      %s78 = int_to_ptr.vmem [resolvable:$true] %s77
      %83 = dma.hbm_to_vmem [thread:$0]  %s76, 1024, %s78, [#allocation8], 128, 128, 8
    $region29: #{_forward_jit.1} parent=1 // pred_fallthru
      _
    // Predicated region
    $region30: #{_forward_jit.1} parent=1 // pred_check
      _
    $region31: #{_forward_jit.1} parent=1 // pred_check_branch
      %85 = sbr.rel (0) target = $region33
    $region32: #{_forward_jit.1} parent=1 // pred_region
      %87 = dma.done [#allocation3], 256
    $region33: #{_forward_jit.1} parent=1 // pred_fallthru
      _
    // Predicated region
    $region34: #{_forward_jit.1} parent=1 // pred_check
      _
    $region35: #{_forward_jit.1} parent=1 // pred_check_branch
      %89 = sbr.rel (0) target = $region37
    $region36: #{_forward_jit.1} parent=1 // pred_region
      %91 = dma.done [#allocation5], 256
    $region37: #{_forward_jit.1} parent=1 // pred_fallthru
      _
    // Predicated region
    $region38: #{_forward_jit.1} parent=1 // pred_check
      _
    $region39: #{_forward_jit.1} parent=1 // pred_check_branch
      %93 = sbr.rel (0) target = $region41
    $region40: #{_forward_jit.1} parent=1 // pred_region
      %95 = dma.done [#allocation5], 2048
    $region41: #{_forward_jit.1} parent=1 // pred_fallthru
      _
    // Predicated region
    $region42: #{_forward_jit.1} parent=1 // pred_check
      _
    $region43: #{_forward_jit.1} parent=1 // pred_check_branch
      %97 = sbr.rel (0) target = $region45
    $region44: #{_forward_jit.1} parent=1 // pred_region
      %99 = dma.done [#allocation8], 512
    $region45: #{_forward_jit.1} parent=1 // pred_fallthru
      _
    // Predicated region
    $region46: #{_forward_jit.1} parent=1 // pred_check
      _
    $region47: #{_forward_jit.1} parent=1 // pred_check_branch
      %101 = sbr.rel (0) target = $region49
    $region48: #{_forward_jit.1} parent=1 // pred_region
      %103 = dma.done [#allocation8], 1024
    $region49: #{_forward_jit.1} parent=1 // pred_fallthru
      _
    %v104 = vld [vmem:[#allocation4] sm:$0xff]
    %v105 = vld [vmem:[#allocation4 + $0x8] sm:$0xff]
    %v106 = vld [vmem:[#allocation2] sm:$0xff]
    %v107 = vld [vmem:[#allocation2 + $0x8] sm:$0xff]
    %vm108 = vcmask 130048
    %v110 = vsel %vm108, %v104, 0
    %v113 = vsel %vm108, %v105, 0
    %115 = vmatpush.msra.mxu0 0.0
    %116 = vmatpush.msra.mxu0 0.0
    %117 = vmatpush.msra.mxu0 0.0
    %118 = vmatpush.msra.mxu0 0.0
    %119 = vmatpush.msra.mxu0 0.0
    %120 = vmatpush.msra.mxu0 0.0
    %121 = vmatpush.msra.mxu0 0.0
    %122 = vmatpush.msra.mxu0 0.0
    %123 = vmatpush.msra.mxu0 0.0
    %124 = vmatpush.msra.mxu0 0.0
    %125 = vmatpush.msra.mxu0 0.0
    %126 = vmatpush.msra.mxu0 0.0
    %127 = vmatpush.msra.mxu0 0.0
    %128 = vmatpush.msra.mxu0 0.0
    %129 = vmatpush.msra.mxu0 %v107
    %130 = vmatpush.msra.mxu0 %v106
    %131 = vmatmul.f32.gmra.mxu0 %v110
    %v132 = vpop.f32.mrf.mxu0
    %v133 = vadd.f32 0.0, %v132
    %134 = vmatmul.f32.gmra.mxu0 %v113
    %v135 = vpop.f32.mrf.mxu0
    %v136 = vadd.f32 0.0, %v135
    %137 = vdwg.mxu0
    %v138 = vld [vmem:[#allocation6] sm:$0xff]
    %v139 = vld [vmem:[#allocation6 + $0x8] sm:$0xff]
    %v140 = vld [vmem:[#allocation6 + $0x10] sm:$0xff]
    %v141 = vld [vmem:[#allocation6 + $0x18] sm:$0xff]
    %v142 = vld [vmem:[#allocation9 + $0x2a] sm:$0x1]
    %v143 = vperm.slane %v142, 0
    %vm144 = vcmask 261120
    %v146 = vsel %vm144, %v133, 0
    %v149 = vsel %vm144, %v136, 0
    %151 = vmatpush.msra.mxu0 0.0
    %152 = vmatpush.msra.mxu0 0.0
    %153 = vmatpush.msra.mxu0 0.0
    %154 = vmatpush.msra.mxu0 0.0
    %155 = vmatpush.msra.mxu0 0.0
    %156 = vmatpush.msra.mxu0 0.0
    %157 = vmatpush.msra.mxu0 0.0
    %158 = vmatpush.msra.mxu0 0.0
    %159 = vmatpush.msra.mxu0 0.0
    %160 = vmatpush.msra.mxu0 0.0
    %161 = vmatpush.msra.mxu0 0.0
    %162 = vmatpush.msra.mxu0 0.0
    %163 = vmatpush.msra.mxu0 %v141
    %164 = vmatpush.msra.mxu0 %v140
    %165 = vmatpush.msra.mxu0 %v139
    %166 = vmatpush.msra.mxu0 %v138
    %167 = vmatmul.f32.gmra.mxu0 %v146
    %v168 = vpop.f32.mrf.mxu0
    %v169 = vadd.f32 %v143, %v168
    %170 = vmatmul.f32.gmra.mxu0 %v149
    %v171 = vpop.f32.mrf.mxu0
    %v172 = vadd.f32 %v143, %v171
    %173 = vdwg.mxu0
    %s174 = scalar_lea.vmem [#allocation6], 32
    %v175 = vld [vmem:[%s174] sm:$0xff]
    %v176 = vld [vmem:[%s174 + $0x8] sm:$0xff]
    %v177 = vld [vmem:[%s174 + $0x10] sm:$0xff]
    %v178 = vld [vmem:[%s174 + $0x18] sm:$0xff]
    %v179 = vld [vmem:[#allocation9 + $0x2b] sm:$0x1]
    %v180 = vperm.slane %v179, 0
    %181 = vmatpush.msra.mxu0 0.0
    %182 = vmatpush.msra.mxu0 0.0
    %183 = vmatpush.msra.mxu0 0.0
    %184 = vmatpush.msra.mxu0 0.0
    %185 = vmatpush.msra.mxu0 0.0
    %186 = vmatpush.msra.mxu0 0.0
    %187 = vmatpush.msra.mxu0 0.0
    %188 = vmatpush.msra.mxu0 0.0
    %189 = vmatpush.msra.mxu0 0.0
    %190 = vmatpush.msra.mxu0 0.0
    %191 = vmatpush.msra.mxu0 0.0
    %192 = vmatpush.msra.mxu0 0.0
    %193 = vmatpush.msra.mxu0 %v178
    %194 = vmatpush.msra.mxu0 %v177
    %195 = vmatpush.msra.mxu0 %v176
    %196 = vmatpush.msra.mxu0 %v175
    %197 = vmatmul.f32.gmra.mxu0 %v146
    %v198 = vpop.f32.mrf.mxu0
    %v199 = vadd.f32 %v180, %v198
    %200 = vmatmul.f32.gmra.mxu0 %v149
    %v201 = vpop.f32.mrf.mxu0
    %v202 = vadd.f32 %v180, %v201
    %203 = vdwg.mxu0
    %s204 = scalar_lea.vmem [#allocation6], 64
    %v205 = vld [vmem:[%s204] sm:$0xff]
    %v206 = vld [vmem:[%s204 + $0x8] sm:$0xff]
    %v207 = vld [vmem:[%s204 + $0x10] sm:$0xff]
    %v208 = vld [vmem:[%s204 + $0x18] sm:$0xff]
    %v209 = vld [vmem:[#allocation9 + $0x2c] sm:$0x1]
    %v210 = vperm.slane %v209, 0
    %211 = vmatpush.msra.mxu0 0.0
    %212 = vmatpush.msra.mxu0 0.0
    %213 = vmatpush.msra.mxu0 0.0
    %214 = vmatpush.msra.mxu0 0.0
    %215 = vmatpush.msra.mxu0 0.0
    %216 = vmatpush.msra.mxu0 0.0
    %217 = vmatpush.msra.mxu0 0.0
    %218 = vmatpush.msra.mxu0 0.0
    %219 = vmatpush.msra.mxu0 0.0
    %220 = vmatpush.msra.mxu0 0.0
    %221 = vmatpush.msra.mxu0 0.0
    %222 = vmatpush.msra.mxu0 0.0
    %223 = vmatpush.msra.mxu0 %v208
    %224 = vmatpush.msra.mxu0 %v207
    %225 = vmatpush.msra.mxu0 %v206
    %226 = vmatpush.msra.mxu0 %v205
    %227 = vmatmul.f32.gmra.mxu0 %v146
    %v228 = vpop.f32.mrf.mxu0
    %v229 = vadd.f32 %v210, %v228
    %230 = vmatmul.f32.gmra.mxu0 %v149
    %v231 = vpop.f32.mrf.mxu0
    %v232 = vadd.f32 %v210, %v231
    %233 = vdwg.mxu0
    %s234 = scalar_lea.vmem [#allocation6], 96
    %v235 = vld [vmem:[%s234] sm:$0xff]
    %v236 = vld [vmem:[%s234 + $0x8] sm:$0xff]
    %v237 = vld [vmem:[%s234 + $0x10] sm:$0xff]
    %v238 = vld [vmem:[%s234 + $0x18] sm:$0xff]
    %v239 = vld [vmem:[#allocation9 + $0x2d] sm:$0x1]
    %v240 = vperm.slane %v239, 0
    %241 = vmatpush.msra.mxu0 0.0
    %242 = vmatpush.msra.mxu0 0.0
    %243 = vmatpush.msra.mxu0 0.0
    %244 = vmatpush.msra.mxu0 0.0
    %245 = vmatpush.msra.mxu0 0.0
    %246 = vmatpush.msra.mxu0 0.0
    %247 = vmatpush.msra.mxu0 0.0
    %248 = vmatpush.msra.mxu0 0.0
    %249 = vmatpush.msra.mxu0 0.0
    %250 = vmatpush.msra.mxu0 0.0
    %251 = vmatpush.msra.mxu0 0.0
    %252 = vmatpush.msra.mxu0 0.0
    %253 = vmatpush.msra.mxu0 %v238
    %254 = vmatpush.msra.mxu0 %v237
    %255 = vmatpush.msra.mxu0 %v236
    %256 = vmatpush.msra.mxu0 %v235
    %257 = vmatmul.f32.gmra.mxu0 %v146
    %v258 = vpop.f32.mrf.mxu0
    %v259 = vadd.f32 %v240, %v258
    %260 = vmatmul.f32.gmra.mxu0 %v149
    %v261 = vpop.f32.mrf.mxu0
    %v262 = vadd.f32 %v240, %v261
    %263 = vdwg.mxu0
    %s264 = scalar_lea.vmem %s3, 96
    %v265 = vld [vmem:[%s264] sm:$0xff]
    %v266 = vld [vmem:[%s264 + $0x8] sm:$0xff]
    %v267 = vld [vmem:[%s264 + $0x10] sm:$0xff]
    %v268 = vld [vmem:[%s264 + $0x18] sm:$0xff]
    %s269 = scalar_lea.vmem %s3, 128
    %v270 = vld [vmem:[%s269] sm:$0xff]
    %v271 = vld [vmem:[%s269 + $0x8] sm:$0xff]
    %v272 = vld [vmem:[%s269 + $0x10] sm:$0xff]
    %v273 = vld [vmem:[%s269 + $0x18] sm:$0xff]
    %v274 = vld [vmem:[#allocation9 + $0x28] sm:$0x1]
    %v275 = vld [vmem:[#allocation9 + $0x29] sm:$0x1]
    %v276 = vperm.slane %v275, 0
    %v277 = vmul.f32 %v169, %v276
    %v278 = vmul.f32 %v172, %v276
    %v280 = vsel %vm144, %v277, 0
    %v283 = vsel %vm144, %v278, 0
    %285 = vmatpush.msra.mxu0 0.0
    %286 = vmatpush.msra.mxu0 0.0
    %287 = vmatpush.msra.mxu0 0.0
    %288 = vmatpush.msra.mxu0 0.0
    %289 = vmatpush.msra.mxu0 0.0
    %290 = vmatpush.msra.mxu0 0.0
    %291 = vmatpush.msra.mxu0 0.0
    %292 = vmatpush.msra.mxu0 0.0
    %293 = vmatpush.msra.mxu0 0.0
    %294 = vmatpush.msra.mxu0 0.0
    %295 = vmatpush.msra.mxu0 0.0
    %296 = vmatpush.msra.mxu0 0.0
    %297 = vmatpush.msra.mxu0 %v268
    %298 = vmatpush.msra.mxu0 %v267
    %299 = vmatpush.msra.mxu0 %v266
    %300 = vmatpush.msra.mxu0 %v265
    %301 = vmatmul.f32.gmra.mxu0 %v280
    %v302 = vpop.f32.mrf.mxu0
    %v303 = vadd.f32 0.0, %v302
    %304 = vmatmul.f32.gmra.mxu0 %v283
    %v305 = vpop.f32.mrf.mxu0
    %v306 = vadd.f32 0.0, %v305
    %307 = vdwg.mxu0
    %v308 = vsel %vm144, %v303, -inf
    %v309 = vrot.slane %v308, 4
    %v310 = vmax.f32 %v308, %v309
    %v311 = vrot.slane %v310, 2
    %v312 = vmax.f32 %v310, %v311
    %v313 = vrot.slane %v312, 1
    %v314 = vmax.f32 %v312, %v313
    %v315 = vsel %vm144, %v306, -inf
    %v316 = vrot.slane %v315, 4
    %v317 = vmax.f32 %v315, %v316
    %v318 = vrot.slane %v317, 2
    %v319 = vmax.f32 %v317, %v318
    %v320 = vrot.slane %v319, 1
    %v321 = vmax.f32 %v319, %v320
    %v322 = vsub.f32 %v303, %v314
    %v323 = vsub.f32 %v306, %v321
    %v324 = vmul.f32 %v322, 1.442695
    %v325 = vpow.pop %v324
    %v326 = vmul.f32 %v323, 1.442695
    %v327 = vpow.pop %v326
    %v328 = vsel %vm144, %v325, 0.0
    %v329 = vrot.slane %v328, 4
    %v330 = vadd.f32 %v328, %v329
    %v331 = vrot.slane %v330, 2
    %v332 = vadd.f32 %v330, %v331
    %v333 = vrot.slane %v332, 1
    %v334 = vadd.f32 %v332, %v333
    %v335 = vsel %vm144, %v327, 0.0
    %v336 = vrot.slane %v335, 4
    %v337 = vadd.f32 %v335, %v336
    %v338 = vrot.slane %v337, 2
    %v339 = vadd.f32 %v337, %v338
    %v340 = vrot.slane %v339, 1
    %v341 = vadd.f32 %v339, %v340
    %v342 = vrcp.pop %v334
    %v343 = vmul.f32 %v334, %v342
    %v344 = vsub.f32 1.0, %v343
    %v345 = vmul.f32 %v342, %v344
    %v346 = vadd.f32 %v342, %v345
    %vm347 = vweird.f32 %v334
    %vm348 = vweird.f32 %v342
    %vm349 = vmor %vm347, %vm348
    %v350 = vsel %vm349, %v342, %v346
    %v351 = vand.u32 2147483647, %v334
    %vm352 = vcmp.eq.f32.partialorder %v351, 8.507059e+37
    %v353 = vand.u32 %v334, 2147483648
    %v354 = vor.u32 1.1754944e-38, %v353
    %v355 = vsel %vm352, %v354, %v350
    %v356 = vmul.f32 %v325, %v355
    %v357 = vrcp.pop %v341
    %v358 = vmul.f32 %v341, %v357
    %v359 = vsub.f32 1.0, %v358
    %v360 = vmul.f32 %v357, %v359
    %v361 = vadd.f32 %v357, %v360
    %vm362 = vweird.f32 %v341
    %vm363 = vweird.f32 %v357
    %vm364 = vmor %vm362, %vm363
    %v365 = vsel %vm364, %v357, %v361
    %v366 = vand.u32 2147483647, %v341
    %vm367 = vcmp.eq.f32.partialorder %v366, 8.507059e+37
    %v368 = vand.u32 %v341, 2147483648
    %v369 = vor.u32 1.1754944e-38, %v368
    %v370 = vsel %vm367, %v369, %v365
    %v371 = vmul.f32 %v327, %v370
    %v373 = vsel %vm144, %v356, 0
    %v376 = vsel %vm144, %v371, 0
    %378 = vmatpush.msra.mxu0 0.0
    %379 = vmatpush.msra.mxu0 0.0
    %380 = vmatpush.msra.mxu0 0.0
    %381 = vmatpush.msra.mxu0 0.0
    %382 = vmatpush.msra.mxu0 0.0
    %383 = vmatpush.msra.mxu0 0.0
    %384 = vmatpush.msra.mxu0 0.0
    %385 = vmatpush.msra.mxu0 0.0
    %386 = vmatpush.msra.mxu0 0.0
    %387 = vmatpush.msra.mxu0 0.0
    %388 = vmatpush.msra.mxu0 0.0
    %389 = vmatpush.msra.mxu0 0.0
    %390 = vmatpush.msra.mxu0 %v273
    %391 = vmatpush.msra.mxu0 %v272
    %392 = vmatpush.msra.mxu0 %v271
    %393 = vmatpush.msra.mxu0 %v270
    %394 = vmatmul.f32.gmra.mxu0 %v373
    %v395 = vpop.f32.mrf.mxu0
    %v396 = vadd.f32 0.0, %v395
    %397 = vmatmul.f32.gmra.mxu0 %v376
    %v398 = vpop.f32.mrf.mxu0
    %v399 = vadd.f32 0.0, %v398
    %400 = vdwg.mxu0
    %v401 = vmul.f32 %v396, %v199
    %v402 = vmul.f32 %v399, %v202
    %v403 = vsel %vm144, %v401, 0.0
    %v404 = vrot.slane %v403, 4
    %v405 = vadd.f32 %v403, %v404
    %v406 = vrot.slane %v405, 2
    %v407 = vadd.f32 %v405, %v406
    %v408 = vrot.slane %v407, 1
    %v409 = vadd.f32 %v407, %v408
    %v410 = vsel %vm144, %v402, 0.0
    %v411 = vrot.slane %v410, 4
    %v412 = vadd.f32 %v410, %v411
    %v413 = vrot.slane %v412, 2
    %v414 = vadd.f32 %v412, %v413
    %v415 = vrot.slane %v414, 1
    %v416 = vadd.f32 %v414, %v415
    %v417 = vld [vmem:[%s3] sm:$0xff]
    %v418 = vld [vmem:[%s3 + $0x8] sm:$0xff]
    %v419 = vld [vmem:[%s3 + $0x10] sm:$0xff]
    %v420 = vld [vmem:[%s3 + $0x18] sm:$0xff]
    %v421 = vld [vmem:[#allocation9 + $0x2e] sm:$0x1]
    %v422 = vperm.slane %v421, 0
    %vm425 = vcmask 1041409
    %v426 = vsel %vm425, %v416, %v409
    %v427 = vsel %vm144, %v426, 0
    %429 = vmatpush.msra.mxu0 0.0
    %430 = vmatpush.msra.mxu0 0.0
    %431 = vmatpush.msra.mxu0 0.0
    %432 = vmatpush.msra.mxu0 0.0
    %433 = vmatpush.msra.mxu0 0.0
    %434 = vmatpush.msra.mxu0 0.0
    %435 = vmatpush.msra.mxu0 0.0
    %436 = vmatpush.msra.mxu0 0.0
    %437 = vmatpush.msra.mxu0 0.0
    %438 = vmatpush.msra.mxu0 0.0
    %439 = vmatpush.msra.mxu0 0.0
    %440 = vmatpush.msra.mxu0 0.0
    %441 = vmatpush.msra.mxu0 %v420
    %442 = vmatpush.msra.mxu0 %v419
    %443 = vmatpush.msra.mxu0 %v418
    %444 = vmatpush.msra.mxu0 %v417
    %445 = vmatmul.f32.gmra.mxu0 %v427
    %v446 = vpop.f32.mrf.mxu0
    %v447 = vadd.f32 %v422, %v446
    %448 = vdwg.mxu0
    %v449 = vperm.slane %v274, 0
    %v450 = vadd.f32 %v449, %v447
    %v451 = vld [vmem:[#allocation9 + $0x32] sm:$0x1]
    %v452 = vld [vmem:[#allocation9 + $0x33] sm:$0x1]
    %vm453 = vcmask 254976
    %v454 = vsel %vm453, %v450, 0.0
    %455 = vadd.xlane.f32.xlu0 %v454
    %v456 = vpop.xlane.xlu0 %455
    %v457 = vrcp.pop 32.0
    %v458 = vmul.f32 32.0, %v457
    %v459 = vsub.f32 1.0, %v458
    %v460 = vmul.f32 %v457, %v459
    %v461 = vadd.f32 %v457, %v460
    %vm462 = vweird.f32 %v457
    %v463 = vsel %vm462, %v457, %v461
    %v464 = vmul.f32 %v456, %v463
    %v465 = vsub.f32 %v450, %v464
    %v466 = vmul.f32 %v465, %v465
    %v467 = vsel %vm453, %v466, 0.0
    %468 = vadd.xlane.f32.xlu0 %v467
    %v469 = vpop.xlane.xlu0 %468
    %v470 = vmul.f32 %v469, %v463
    %v471 = vadd.f32 %v470, 1e-05
    %v472 = vrsqrt.pop %v471
    %v473 = vmul.f32 %v472, %v471
    %v474 = vmul.f32 %v473, %v472
    %v475 = vmul.f32 0.5, %v474
    %v476 = vsub.f32 1.5, %v475
    %v477 = vmul.f32 %v472, %v476
    %vm478 = vweird.f32 %v471
    %vm479 = vweird.f32 %v472
    %vm480 = vmor %vm478, %vm479
    %v481 = vsel %vm480, %v472, %v477
    %v482 = vmul.f32 %v465, %v481
    %v483 = vperm.slane %v451, 0
    %v484 = vmul.f32 %v482, %v483
    %v485 = vperm.slane %v452, 0
    %v486 = vadd.f32 %v484, %v485
    %v487 = vld [vmem:[#allocation7] sm:$0xff]
    %v488 = vld [vmem:[#allocation7 + $0x8] sm:$0xff]
    %v489 = vld [vmem:[#allocation7 + $0x10] sm:$0xff]
    %v490 = vld [vmem:[#allocation7 + $0x18] sm:$0xff]
    %v491 = vld [vmem:[#allocation9 + $0x38] sm:$0x1]
    %v492 = vperm.slane %v491, 0
    %v494 = vsel %vm144, %v486, 0
    %496 = vmatpush.msra.mxu0 0.0
    %497 = vmatpush.msra.mxu0 0.0
    %498 = vmatpush.msra.mxu0 0.0
    %499 = vmatpush.msra.mxu0 0.0
    %500 = vmatpush.msra.mxu0 0.0
    %501 = vmatpush.msra.mxu0 0.0
    %502 = vmatpush.msra.mxu0 0.0
    %503 = vmatpush.msra.mxu0 0.0
    %504 = vmatpush.msra.mxu0 0.0
    %505 = vmatpush.msra.mxu0 0.0
    %506 = vmatpush.msra.mxu0 0.0
    %507 = vmatpush.msra.mxu0 0.0
    %508 = vmatpush.msra.mxu0 %v490
    %509 = vmatpush.msra.mxu0 %v489
    %510 = vmatpush.msra.mxu0 %v488
    %511 = vmatpush.msra.mxu0 %v487
    %512 = vmatmul.f32.gmra.mxu0 %v494
    %v513 = vpop.f32.mrf.mxu0
    %v514 = vadd.f32 %v492, %v513
    %515 = vdwg.mxu0
    %v516 = vmax.f32 %v514, 0.0
    %v517 = vld [vmem:[%s5] sm:$0xff]
    %v518 = vld [vmem:[%s5 + $0x8] sm:$0xff]
    %v519 = vld [vmem:[%s5 + $0x10] sm:$0xff]
    %v520 = vld [vmem:[%s5 + $0x18] sm:$0xff]
    %v521 = vld [vmem:[%s5 + $0x20] sm:$0xff]
    %v522 = vld [vmem:[%s5 + $0x28] sm:$0xff]
    %v523 = vld [vmem:[%s5 + $0x30] sm:$0xff]
    %v524 = vld [vmem:[%s5 + $0x38] sm:$0xff]
    %v525 = vld [vmem:[%s5 + $0x40] sm:$0xff]
    %v526 = vld [vmem:[%s5 + $0x48] sm:$0xff]
    %v527 = vld [vmem:[%s5 + $0x50] sm:$0xff]
    %v528 = vld [vmem:[%s5 + $0x58] sm:$0xff]
    %v529 = vld [vmem:[%s5 + $0x60] sm:$0xff]
    %v530 = vld [vmem:[%s5 + $0x68] sm:$0xff]
    %v531 = vld [vmem:[%s5 + $0x70] sm:$0xff]
    %v532 = vld [vmem:[%s5 + $0x78] sm:$0xff]
    %v533 = vld [vmem:[#allocation9 + $0x31] sm:$0x1]
    %v534 = vperm.slane %v533, 0
    %535 = vmatpush.msra.mxu0 %v532
    %536 = vmatpush.msra.mxu0 %v531
    %537 = vmatpush.msra.mxu0 %v530
    %538 = vmatpush.msra.mxu0 %v529
    %539 = vmatpush.msra.mxu0 %v528
    %540 = vmatpush.msra.mxu0 %v527
    %541 = vmatpush.msra.mxu0 %v526
    %542 = vmatpush.msra.mxu0 %v525
    %543 = vmatpush.msra.mxu0 %v524
    %544 = vmatpush.msra.mxu0 %v523
    %545 = vmatpush.msra.mxu0 %v522
    %546 = vmatpush.msra.mxu0 %v521
    %547 = vmatpush.msra.mxu0 %v520
    %548 = vmatpush.msra.mxu0 %v519
    %549 = vmatpush.msra.mxu0 %v518
    %550 = vmatpush.msra.mxu0 %v517
    %551 = vmatmul.f32.gmra.mxu0 %v516
    %v552 = vpop.f32.mrf.mxu0
    %v553 = vadd.f32 %v534, %v552
    %554 = vdwg.mxu0
    %v555 = vadd.f32 %v486, %v553
    %v556 = vld [vmem:[#allocation9 + $0x34] sm:$0x1]
    %v557 = vld [vmem:[#allocation9 + $0x35] sm:$0x1]
    %v558 = vsel %vm453, %v555, 0.0
    %559 = vadd.xlane.f32.xlu0 %v558
    %v560 = vpop.xlane.xlu0 %559
    %v561 = vmul.f32 %v560, %v463
    %v562 = vsub.f32 %v555, %v561
    %v563 = vmul.f32 %v562, %v562
    %v564 = vsel %vm453, %v563, 0.0
    %565 = vadd.xlane.f32.xlu0 %v564
    %v566 = vpop.xlane.xlu0 %565
    %v567 = vmul.f32 %v566, %v463
    %v568 = vadd.f32 %v567, 1e-05
    %v569 = vrsqrt.pop %v568
    %v570 = vmul.f32 %v569, %v568
    %v571 = vmul.f32 %v570, %v569
    %v572 = vmul.f32 0.5, %v571
    %v573 = vsub.f32 1.5, %v572
    %v574 = vmul.f32 %v569, %v573
    %vm575 = vweird.f32 %v568
    %vm576 = vweird.f32 %v569
    %vm577 = vmor %vm575, %vm576
    %v578 = vsel %vm577, %v569, %v574
    %v579 = vmul.f32 %v562, %v578
    %v580 = vperm.slane %v556, 0
    %v581 = vmul.f32 %v579, %v580
    %v582 = vperm.slane %v557, 0
    %v583 = vadd.f32 %v581, %v582
    %s584 = scalar_lea.vmem %s3, 32
    %v585 = vld [vmem:[%s584] sm:$0xff]
    %v586 = vld [vmem:[%s584 + $0x8] sm:$0xff]
    %v587 = vld [vmem:[%s584 + $0x10] sm:$0xff]
    %v588 = vld [vmem:[%s584 + $0x18] sm:$0xff]
    %v589 = vld [vmem:[#allocation9 + $0x2f] sm:$0x1]
    %v590 = vperm.slane %v589, 0
    %v592 = vsel %vm144, %v583, 0
    %594 = vmatpush.msra.mxu0 0.0
    %595 = vmatpush.msra.mxu0 0.0
    %596 = vmatpush.msra.mxu0 0.0
    %597 = vmatpush.msra.mxu0 0.0
    %598 = vmatpush.msra.mxu0 0.0
    %599 = vmatpush.msra.mxu0 0.0
    %600 = vmatpush.msra.mxu0 0.0
    %601 = vmatpush.msra.mxu0 0.0
    %602 = vmatpush.msra.mxu0 0.0
    %603 = vmatpush.msra.mxu0 0.0
    %604 = vmatpush.msra.mxu0 0.0
    %605 = vmatpush.msra.mxu0 0.0
    %606 = vmatpush.msra.mxu0 %v588
    %607 = vmatpush.msra.mxu0 %v587
    %608 = vmatpush.msra.mxu0 %v586
    %609 = vmatpush.msra.mxu0 %v585
    %610 = vmatmul.f32.gmra.mxu0 %v592
    %v611 = vpop.f32.mrf.mxu0
    %v612 = vadd.f32 %v590, %v611
    %613 = vdwg.mxu0
    %v615 = vrot.slane %v612, 1
    %v616 = vperm.slane %v612, 0
    %v617 = vperm.slane %v615, 0
    %v620 = vmul.f32 %v229, %v616
    %v621 = vmul.f32 %v232, %v617
    %v623 = vsel %vm144, %v620, 0
    %v626 = vsel %vm144, %v621, 0
    %628 = vmatpush.msra.mxu0 0.0
    %629 = vmatpush.msra.mxu0 0.0
    %630 = vmatpush.msra.mxu0 0.0
    %631 = vmatpush.msra.mxu0 0.0
    %632 = vmatpush.msra.mxu0 0.0
    %633 = vmatpush.msra.mxu0 0.0
    %634 = vmatpush.msra.mxu0 0.0
    %635 = vmatpush.msra.mxu0 0.0
    %636 = vmatpush.msra.mxu0 0.0
    %637 = vmatpush.msra.mxu0 0.0
    %638 = vmatpush.msra.mxu0 0.0
    %639 = vmatpush.msra.mxu0 0.0
    %640 = vmatpush.msra.mxu0 %v268
    %641 = vmatpush.msra.mxu0 %v267
    %642 = vmatpush.msra.mxu0 %v266
    %643 = vmatpush.msra.mxu0 %v265
    %644 = vmatmul.f32.gmra.mxu0 %v623
    %v645 = vpop.f32.mrf.mxu0
    %v646 = vadd.f32 0.0, %v645
    %647 = vmatmul.f32.gmra.mxu0 %v626
    %v648 = vpop.f32.mrf.mxu0
    %v649 = vadd.f32 0.0, %v648
    %650 = vdwg.mxu0
    %v651 = vsel %vm144, %v646, -inf
    %v652 = vrot.slane %v651, 4
    %v653 = vmax.f32 %v651, %v652
    %v654 = vrot.slane %v653, 2
    %v655 = vmax.f32 %v653, %v654
    %v656 = vrot.slane %v655, 1
    %v657 = vmax.f32 %v655, %v656
    %v658 = vsel %vm144, %v649, -inf
    %v659 = vrot.slane %v658, 4
    %v660 = vmax.f32 %v658, %v659
    %v661 = vrot.slane %v660, 2
    %v662 = vmax.f32 %v660, %v661
    %v663 = vrot.slane %v662, 1
    %v664 = vmax.f32 %v662, %v663
    %v665 = vsub.f32 %v646, %v657
    %v666 = vsub.f32 %v649, %v664
    %v667 = vmul.f32 %v665, 1.442695
    %v668 = vpow.pop %v667
    %v669 = vmul.f32 %v666, 1.442695
    %v670 = vpow.pop %v669
    %v671 = vsel %vm144, %v668, 0.0
    %v672 = vrot.slane %v671, 4
    %v673 = vadd.f32 %v671, %v672
    %v674 = vrot.slane %v673, 2
    %v675 = vadd.f32 %v673, %v674
    %v676 = vrot.slane %v675, 1
    %v677 = vadd.f32 %v675, %v676
    %v678 = vsel %vm144, %v670, 0.0
    %v679 = vrot.slane %v678, 4
    %v680 = vadd.f32 %v678, %v679
    %v681 = vrot.slane %v680, 2
    %v682 = vadd.f32 %v680, %v681
    %v683 = vrot.slane %v682, 1
    %v684 = vadd.f32 %v682, %v683
    %v685 = vrcp.pop %v677
    %v686 = vmul.f32 %v677, %v685
    %v687 = vsub.f32 1.0, %v686
    %v688 = vmul.f32 %v685, %v687
    %v689 = vadd.f32 %v685, %v688
    %vm690 = vweird.f32 %v677
    %vm691 = vweird.f32 %v685
    %vm692 = vmor %vm690, %vm691
    %v693 = vsel %vm692, %v685, %v689
    %v694 = vand.u32 2147483647, %v677
    %vm695 = vcmp.eq.f32.partialorder %v694, 8.507059e+37
    %v696 = vand.u32 %v677, 2147483648
    %v697 = vor.u32 1.1754944e-38, %v696
    %v698 = vsel %vm695, %v697, %v693
    %v699 = vmul.f32 %v668, %v698
    %v700 = vrcp.pop %v684
    %v701 = vmul.f32 %v684, %v700
    %v702 = vsub.f32 1.0, %v701
    %v703 = vmul.f32 %v700, %v702
    %v704 = vadd.f32 %v700, %v703
    %vm705 = vweird.f32 %v684
    %vm706 = vweird.f32 %v700
    %vm707 = vmor %vm705, %vm706
    %v708 = vsel %vm707, %v700, %v704
    %v709 = vand.u32 2147483647, %v684
    %vm710 = vcmp.eq.f32.partialorder %v709, 8.507059e+37
    %v711 = vand.u32 %v684, 2147483648
    %v712 = vor.u32 1.1754944e-38, %v711
    %v713 = vsel %vm710, %v712, %v708
    %v714 = vmul.f32 %v670, %v713
    %v716 = vsel %vm144, %v699, 0
    %v719 = vsel %vm144, %v714, 0
    %721 = vmatpush.msra.mxu0 0.0
    %722 = vmatpush.msra.mxu0 0.0
    %723 = vmatpush.msra.mxu0 0.0
    %724 = vmatpush.msra.mxu0 0.0
    %725 = vmatpush.msra.mxu0 0.0
    %726 = vmatpush.msra.mxu0 0.0
    %727 = vmatpush.msra.mxu0 0.0
    %728 = vmatpush.msra.mxu0 0.0
    %729 = vmatpush.msra.mxu0 0.0
    %730 = vmatpush.msra.mxu0 0.0
    %731 = vmatpush.msra.mxu0 0.0
    %732 = vmatpush.msra.mxu0 0.0
    %733 = vmatpush.msra.mxu0 %v273
    %734 = vmatpush.msra.mxu0 %v272
    %735 = vmatpush.msra.mxu0 %v271
    %736 = vmatpush.msra.mxu0 %v270
    %737 = vmatmul.f32.gmra.mxu0 %v716
    %v738 = vpop.f32.mrf.mxu0
    %v739 = vadd.f32 0.0, %v738
    %740 = vmatmul.f32.gmra.mxu0 %v719
    %v741 = vpop.f32.mrf.mxu0
    %v742 = vadd.f32 0.0, %v741
    %743 = vdwg.mxu0
    %v744 = vmul.f32 %v739, %v259
    %v745 = vmul.f32 %v742, %v262
    %v746 = vsel %vm144, %v744, 0.0
    %v747 = vrot.slane %v746, 4
    %v748 = vadd.f32 %v746, %v747
    %v749 = vrot.slane %v748, 2
    %v750 = vadd.f32 %v748, %v749
    %v751 = vrot.slane %v750, 1
    %v752 = vadd.f32 %v750, %v751
    %v753 = vsel %vm144, %v745, 0.0
    %v754 = vrot.slane %v753, 4
    %v755 = vadd.f32 %v753, %v754
    %v756 = vrot.slane %v755, 2
    %v757 = vadd.f32 %v755, %v756
    %v758 = vrot.slane %v757, 1
    %v759 = vadd.f32 %v757, %v758
    %s760 = scalar_lea.vmem %s3, 64
    %v761 = vld [vmem:[%s760] sm:$0xff]
    %v762 = vld [vmem:[%s760 + $0x8] sm:$0xff]
    %v763 = vld [vmem:[%s760 + $0x10] sm:$0xff]
    %v764 = vld [vmem:[%s760 + $0x18] sm:$0xff]
    %v765 = vld [vmem:[#allocation9 + $0x30] sm:$0x1]
    %v766 = vperm.slane %v765, 0
    %v769 = vsel %vm425, %v759, %v752
    %v770 = vsel %vm144, %v769, 0
    %772 = vmatpush.msra.mxu0 0.0
    %773 = vmatpush.msra.mxu0 0.0
    %774 = vmatpush.msra.mxu0 0.0
    %775 = vmatpush.msra.mxu0 0.0
    %776 = vmatpush.msra.mxu0 0.0
    %777 = vmatpush.msra.mxu0 0.0
    %778 = vmatpush.msra.mxu0 0.0
    %779 = vmatpush.msra.mxu0 0.0
    %780 = vmatpush.msra.mxu0 0.0
    %781 = vmatpush.msra.mxu0 0.0
    %782 = vmatpush.msra.mxu0 0.0
    %783 = vmatpush.msra.mxu0 0.0
    %784 = vmatpush.msra.mxu0 %v764
    %785 = vmatpush.msra.mxu0 %v763
    %786 = vmatpush.msra.mxu0 %v762
    %787 = vmatpush.msra.mxu0 %v761
    %788 = vmatmul.f32.gmra.mxu0 %v770
    %v789 = vpop.f32.mrf.mxu0
    %v790 = vadd.f32 %v766, %v789
    %791 = vdwg.mxu0
    %v792 = vadd.f32 %v583, %v790
    %v793 = vld [vmem:[#allocation9 + $0x36] sm:$0x1]
    %v794 = vld [vmem:[#allocation9 + $0x37] sm:$0x1]
    %v795 = vsel %vm453, %v792, 0.0
    %796 = vadd.xlane.f32.xlu0 %v795
    %v797 = vpop.xlane.xlu0 %796
    %v798 = vmul.f32 %v797, %v463
    %v799 = vsub.f32 %v792, %v798
    %v800 = vmul.f32 %v799, %v799
    %v801 = vsel %vm453, %v800, 0.0
    %802 = vadd.xlane.f32.xlu0 %v801
    %v803 = vpop.xlane.xlu0 %802
    %v804 = vmul.f32 %v803, %v463
    %v805 = vadd.f32 %v804, 1e-05
    %v806 = vrsqrt.pop %v805
    %v807 = vmul.f32 %v806, %v805
    %v808 = vmul.f32 %v807, %v806
    %v809 = vmul.f32 0.5, %v808
    %v810 = vsub.f32 1.5, %v809
    %v811 = vmul.f32 %v806, %v810
    %vm812 = vweird.f32 %v805
    %vm813 = vweird.f32 %v806
    %vm814 = vmor %vm812, %vm813
    %v815 = vsel %vm814, %v806, %v811
    %v816 = vmul.f32 %v799, %v815
    %v817 = vperm.slane %v793, 0
    %v818 = vmul.f32 %v816, %v817
    %v819 = vperm.slane %v794, 0
    %v820 = vadd.f32 %v818, %v819
    %vm821 = vcmask 31744
    %v822 = vsel %vm821, %v699, 0.0
    %823 = vadd.xlane.f32.xlu0 %v822
    %v824 = vpop.xlane.xlu0 %823
    %v825 = vsel %vm821, %v714, 0.0
    %826 = vadd.xlane.f32.xlu0 %v825
    %v827 = vpop.xlane.xlu0 %826
    %v828 = vrcp.pop 4.0
    %v829 = vmul.f32 4.0, %v828
    %v830 = vsub.f32 1.0, %v829
    %v831 = vmul.f32 %v828, %v830
    %v832 = vadd.f32 %v828, %v831
    %vm833 = vweird.f32 %v828
    %v834 = vsel %vm833, %v828, %v832
    %v835 = vmul.f32 %v824, %v834
    %v836 = vmul.f32 %v827, %v834
    %v837 = vld [vmem:[#allocation9] sm:$0xff]
    %v838 = vld [vmem:[#allocation9 + $0x8] sm:$0xff]
    %v839 = vld [vmem:[#allocation9 + $0x10] sm:$0xff]
    %v840 = vld [vmem:[#allocation9 + $0x18] sm:$0xff]
    %v841 = vld [vmem:[#allocation9 + $0x20] sm:$0xff]
    %v844 = vlaneseq
    %v845 = vand.u32 %v844, 127
    %v846 = vperm.slane %v835, %v845
    %v847 = vperm.slane %v836, %v845
    %v848 = vsel %vm425, %v847, %v846
    %vm849 = vcmask 64512
    %v850 = vsel %vm849, %v848, 0
    %852 = vmatpush.msra.mxu0 0.0
    %853 = vmatpush.msra.mxu0 0.0
    %854 = vmatpush.msra.mxu0 0.0
    %855 = vmatpush.msra.mxu0 0.0
    %856 = vmatpush.msra.mxu0 0.0
    %857 = vmatpush.msra.mxu0 0.0
    %858 = vmatpush.msra.mxu0 0.0
    %859 = vmatpush.msra.mxu0 0.0
    %860 = vmatpush.msra.mxu0 0.0
    %861 = vmatpush.msra.mxu0 0.0
    %862 = vmatpush.msra.mxu0 0.0
    %863 = vmatpush.msra.mxu0 0.0
    %864 = vmatpush.msra.mxu0 0.0
    %865 = vmatpush.msra.mxu0 0.0
    %866 = vmatpush.msra.mxu0 0.0
    %867 = vmatpush.msra.mxu0 %v841
    %868 = vmatmul.f32.gmra.mxu0 %v850
    %v869 = vpop.f32.mrf.mxu0
    %v870 = vadd.f32 0.0, %v869
    %871 = vdwg.mxu0
    %v873 = vsel %vm144, %v820, 0
    %875 = vmatpush.msra.mxu0 0.0
    %876 = vmatpush.msra.mxu0 0.0
    %877 = vmatpush.msra.mxu0 0.0
    %878 = vmatpush.msra.mxu0 0.0
    %879 = vmatpush.msra.mxu0 0.0
    %880 = vmatpush.msra.mxu0 0.0
    %881 = vmatpush.msra.mxu0 0.0
    %882 = vmatpush.msra.mxu0 0.0
    %883 = vmatpush.msra.mxu0 0.0
    %884 = vmatpush.msra.mxu0 0.0
    %885 = vmatpush.msra.mxu0 0.0
    %886 = vmatpush.msra.mxu0 0.0
    %887 = vmatpush.msra.mxu0 %v840
    %888 = vmatpush.msra.mxu0 %v839
    %889 = vmatpush.msra.mxu0 %v838
    %890 = vmatpush.msra.mxu0 %v837
    %891 = vmatmul.f32.gmra.mxu0 %v873
    %v892 = vpop.f32.mrf.mxu0
    %v893 = vadd.f32 %v870, %v892
    %894 = vdwg.mxu0
    %895 = vst [vmem:[%s7] sm:$0x3] %v893
    // Predicated region
    $region50: #{_forward_jit.1} parent=1 // pred_check
      _
    $region51: #{_forward_jit.1} parent=1 // pred_check_branch
      %897 = sbr.rel (0) target = $region53
    $region52: #{_forward_jit.1} parent=1 // pred_region
      _
    $region53: #{_forward_jit.1} parent=1 // pred_fallthru
      _
    // Predicated region
    $region54: #{_forward_jit.1} parent=1 // pred_check
      _
    $region55: #{_forward_jit.1} parent=1 // pred_check_branch
      %899 = sbr.rel (0) target = $region57
    $region56: #{_forward_jit.1} parent=1 // pred_region
      _
    $region57: #{_forward_jit.1} parent=1 // pred_fallthru
      _
    %900 = vsyncpa [#allocation3], 1
    %901 = vsyncpa [#allocation5], 1
    %902 = vsyncpa [#allocation8], 1

</llo_original>
